<compile_context>
chip_gen: v5e
topology: v5e:2x2
jax: 0.10.0
libtpu: 0.0.40
codegen_flags: <defaults>
</compile_context>

<pallas_src>
import jax
import jax.numpy as jnp
from jax.experimental import pallas as pl
from jax.experimental.pallas import tpu as pltpu

IN_FEATURES = 16 * 16 * 2   # 512
OUT_FEATURES = 10
OUT_PAD = 128               # lane-dense padded output width
DEFAULT_TILE_M = 1024       # ~4 MiB double-buffered x tile; well under scoped VMEM


def _round_up(x, m):
    return (x + m - 1) // m * m


def _linear_add_relu_kernel(x_ref, w_ref, bias_ref, o_ref):
    # x_ref:    (TM, 512)  f32   (cast to bf16 in-kernel -> halves x HBM traffic
    #                             vs a separate XLA cast pass)
    # w_ref:    (512, 128) bf16
    # bias_ref: (1, 128)   f32   (bias + other, zero-padded past lane 10)
    # o_ref:    (TM, 128)  bf16
    x_bf = x_ref[...].astype(jnp.bfloat16)
    y = jnp.dot(x_bf, w_ref[...], preferred_element_type=jnp.float32)
    y = y + bias_ref[...]                      # broadcast (1, 128) over rows
    # Epilogue math stays f32 (v5e VPU has no bf16 path); store is bf16.
    o_ref[...] = jnp.maximum(y, 0.0).astype(o_ref.dtype)


def prepare_params(w_t, b, other):
    """One-time parameter prep (hoisted out of the per-call path).

    w_t: (512, 10) f32  (Linear weight stored transposed: (in, out))
    b, other: (1, 10) f32
    Returns (w_bf: (512, 128) bf16, bias_p: (1, 128) f32).

    NOTE: lanes 10..127 of both W and bias MUST stay exactly zero so the
    padded output lanes are exact zeros after ReLU (they are sliced away
    outside the kernel, but must not be garbage).
    """
    bias = (b + other).astype(jnp.float32)
    bias_p = jnp.zeros((1, OUT_PAD), jnp.float32).at[:, :OUT_FEATURES].set(bias)
    w_p = jnp.zeros((IN_FEATURES, OUT_PAD), jnp.float32).at[:, :OUT_FEATURES].set(
        w_t.astype(jnp.float32))
    return w_p.astype(jnp.bfloat16), bias_p


def model_forward(x, w_bf, bias_p, *, tile_m=DEFAULT_TILE_M):
    """x: (B, 512) f32. Returns (B, 10) f32."""
    B = x.shape[0]

    # Batch tile: multiple of 8 (sublane), >=2 grid steps when B allows
    # (v7x has 2 TensorCores; a 1-step grid disables megacore + pipelining),
    # capped at tile_m.
    tm = min(tile_m, max(8, _round_up(pl.cdiv(B, 2), 8)))
    grid = (pl.cdiv(B, tm),)

    out_padded = pl.pallas_call(
        _linear_add_relu_kernel,
        out_shape=jax.ShapeDtypeStruct((B, OUT_PAD), jnp.bfloat16),
        grid_spec=pl.GridSpec(
            grid=grid,
            in_specs=[
                pl.BlockSpec((tm, IN_FEATURES), lambda i: (i, 0)),
                pl.BlockSpec((IN_FEATURES, OUT_PAD), lambda i: (0, 0)),
                pl.BlockSpec((1, OUT_PAD), lambda i: (0, 0)),
            ],
            out_specs=pl.BlockSpec((tm, OUT_PAD), lambda i: (i, 0)),
        ),
        compiler_params=pltpu.CompilerParams(
            dimension_semantics=("parallel",)),
    )(x.astype(jnp.float32), w_bf, bias_p)

    # Tiny fused slice + cast back to the module's f32 output dtype.
    # TODO(synk): if a downstream consumer exists, feed it the padded bf16
    # slab and slice only at the very end instead.
    return out_padded[:B, :OUT_FEATURES].astype(jnp.float32)


def reference_forward_f32(x, w_t, b, other):
    return jnp.maximum(x @ w_t + b + other, 0.0)


def reference_forward_bf16(x, w_t, b, other):
    # Same numerics as the kernel: bf16 matmul inputs, f32 accumulation.
    xf = x.astype(jnp.bfloat16).astype(jnp.float32)
    wf = w_t.astype(jnp.bfloat16).astype(jnp.float32)
    return jnp.maximum(xf @ wf + (b + other), 0.0)


def _check(B, x, w_t, b, other, w_bf, bias_p):
    out = jax.block_until_ready(model_forward(x, w_bf, bias_p))
    assert out.shape == (B, OUT_FEATURES)
    # Tight check vs a reference with matching bf16 matmul numerics
    # (output is bf16-rounded, hence ~1e-2 tolerance).
    ref_bf16 = reference_forward_bf16(x, w_t, b, other)
    assert jnp.allclose(out, ref_bf16, atol=2e-2, rtol=2e-2), \
        f"mismatch vs bf16 reference (B={B})"
    # Loose check vs the full-f32 reference (bf16 input/output rounding).
    ref_f32 = reference_forward_f32(x, w_t, b, other)
    assert jnp.allclose(out, ref_f32, atol=5e-2, rtol=5e-2), \
        f"mismatch vs f32 reference (B={B})"


if __name__ == "__main__":
    key = jax.random.PRNGKey(0)
    kw, kb, ko, kx1, kx2 = jax.random.split(key, 5)

    # Deterministic "parameters" (Linear weight stored transposed: (in, out)).
    w_t = jax.random.normal(kw, (IN_FEATURES, OUT_FEATURES), dtype=jnp.float32) * 0.05
    b = jax.random.normal(kb, (1, OUT_FEATURES), dtype=jnp.float32) * 0.1
    other = jax.random.normal(ko, (1, OUT_FEATURES), dtype=jnp.float32)

    # Parameter prep happens once, outside the forward path.
    w_bf, bias_p = prepare_params(w_t, b, other)

    # Small primary check.
    B1 = 8
    x1 = jax.random.normal(kx1, (B1, IN_FEATURES), dtype=jnp.float32)
    _check(B1, x1, w_t, b, other, w_bf, bias_p)

    # Secondary check exercising a multi-step grid with a masked partial
    # last block (B not a multiple of tm).
    B2 = 300
    x2 = jax.random.normal(kx2, (B2, IN_FEATURES), dtype=jnp.float32)
    _check(B2, x2, w_t, b, other, w_bf, bias_p)

    print("KERNEL_OK")
</pallas_src>

<mosaic_0001>
module attributes {stable_mosaic.version = 11 : i64} {
  func.func @_linear_add_relu_kernel(%arg0: i32, %arg1: memref<8x512xf32, #tpu.memory_space<vmem>>, %arg2: memref<512x128xbf16, #tpu.memory_space<vmem>>, %arg3: memref<1x128xf32, #tpu.memory_space<vmem>>, %arg4: memref<8x128xbf16, #tpu.memory_space<vmem>>) attributes {dimension_semantics = [#tpu.dimension_semantics<parallel>], iteration_bounds = array<i64: 1>, scalar_prefetch = 0 : i64, scratch_operands = 0 : i64, tpu.core_type = #tpu.core_type<tc>, window_params = [{transform_indices = @transform_0, window_bounds = array<i64: 8, 512>}, {pipeline_mode = #tpu.pipeline_mode<synchronous>, transform_indices = @transform_1, window_bounds = array<i64: 512, 128>}, {pipeline_mode = #tpu.pipeline_mode<synchronous>, transform_indices = @transform_2, window_bounds = array<i64: 1, 128>}, {transform_indices = @transform_3, window_bounds = array<i64: 8, 128>}]} {
    %c0 = arith.constant 0 : index
    %c0_0 = arith.constant 0 : index
    %0 = vector.load %arg1[%c0, %c0_0] : memref<8x512xf32, #tpu.memory_space<vmem>>, vector<8x512xf32>
    %1 = arith.truncf %0 : vector<8x512xf32> to vector<8x512xbf16>
    %c0_1 = arith.constant 0 : index
    %c0_2 = arith.constant 0 : index
    %2 = vector.load %arg2[%c0_1, %c0_2] : memref<512x128xbf16, #tpu.memory_space<vmem>>, vector<512x128xbf16>
    %cst = arith.constant dense<0.000000e+00> : vector<8x128xf32>
    %3 = tpu.matmul %1, %2, %cst {dimension_numbers = #tpu.dot_dimension_numbers<[1], [0], [0], [1], [0, 0, 1, 1], [], []>} : vector<8x512xbf16>, vector<512x128xbf16>, vector<8x128xf32> -> vector<8x128xf32>
    %c0_3 = arith.constant 0 : index
    %c0_4 = arith.constant 0 : index
    %4 = vector.load %arg3[%c0_3, %c0_4] : memref<1x128xf32, #tpu.memory_space<vmem>>, vector<1x128xf32>
    %5 = vector.broadcast %4 : vector<1x128xf32> to vector<8x128xf32>
    %6 = arith.addf %3, %5 : vector<8x128xf32>
    %cst_5 = arith.constant 0.000000e+00 : f32
    %7 = vector.broadcast %cst_5 : f32 to vector<8x128xf32>
    %8 = arith.maximumf %6, %7 : vector<8x128xf32>
    %9 = arith.truncf %8 : vector<8x128xf32> to vector<8x128xbf16>
    %c0_6 = arith.constant 0 : index
    %c0_7 = arith.constant 0 : index
    %10 = vector.load %arg4[%c0_6, %c0_7] : memref<8x128xbf16, #tpu.memory_space<vmem>>, vector<8x128xbf16>
    tpu.vector_store %arg4[%c0_6, %c0_7], %9 {strides = array<i32>} : memref<8x128xbf16, #tpu.memory_space<vmem>>, vector<8x128xbf16>,
    return
  }
  func.func @transform_0(%arg0: i32) -> (i32, i32) {
    %c0_i32 = arith.constant 0 : i32
    %c0_i32_0 = arith.constant 0 : i32
    return %arg0, %c0_i32 : i32, i32
  }
  func.func @transform_1(%arg0: i32) -> (i32, i32) {
    %c0_i32 = arith.constant 0 : i32
    %c0_i32_0 = arith.constant 0 : i32
    %c0_i32_1 = arith.constant 0 : i32
    return %c0_i32, %c0_i32_0 : i32, i32
  }
  func.func @transform_2(%arg0: i32) -> (i32, i32) {
    %c0_i32 = arith.constant 0 : i32
    %c0_i32_0 = arith.constant 0 : i32
    %c0_i32_1 = arith.constant 0 : i32
    return %c0_i32, %c0_i32_0 : i32, i32
  }
  func.func @transform_3(%arg0: i32) -> (i32, i32) {
    %c0_i32 = arith.constant 0 : i32
    %c0_i32_0 = arith.constant 0 : i32
    return %arg0, %c0_i32 : i32, i32
  }
}

</mosaic_0001>

<llo_original>
// kernel: tpu_custom_call.1
$region0: #{tpu_custom_call.1}
  #allocation0 [shape = 'u32[]', space=smem, size = 0x4, offset = 0x4, fixed_abs, tag = 'smem constant byte address 0x4 - core index']
  #allocation1 [shape = 'u32[72,128]{1,0:T(1,128)}', space=vmem, size = 0x9000, scoped, tag = 'internal scratch']
  %s0 = inlined_call_operand.hbm [shape: f32[8,512], index: 0, kind: input, shape index: {}]
  %s1 = inlined_call_operand.hbm [shape: bf16[512,128], index: 1, kind: input, shape index: {}]
  %s2 = inlined_call_operand.vmem [shape: f32[1,128], index: 2, kind: input, shape index: {}]
  %s3 = inlined_call_operand.hbm [shape: bf16[8,128], index: 3, kind: output, shape index: {}]
  %s4 = sld [smem:[#allocation0]]
  $region30: #{tpu_custom_call.1} parent=0
    _
  %s6 = ssub.s32 1, %s4
  %s7 = scalar_select 0, %s6, %s4
  $region1: #{tpu_custom_call.1} parent=0
    #allocation2 [shape = 'u8[16384]{0}', space=vmem, size = 0x4000, scoped, tag = 'input window, operand 0, single buffered']
    #allocation3 [shape = 's32[1]{0}', space=sflag, size = 0x4, scoped, tag = 'scoped memory for tpu_custom_call.1']
    #allocation4 [shape = 's32[1]{0}', space=sflag, size = 0x4, scoped, tag = 'scoped memory for tpu_custom_call.1']
    #allocation5 [shape = 'u8[131072]{0}', space=vmem, size = 0x20000, scoped, tag = 'input window, operand 1, single buffered']
    #allocation6 [shape = 's32[1]{0}', space=sflag, size = 0x4, scoped, tag = 'scoped memory for tpu_custom_call.1']
    #allocation7 [shape = 'u8[2048]{0}', space=vmem, size = 0x800, scoped, tag = 'output window, operand 0, single buffered']
    %8 = vsyncpa [#allocation3], 0
    %9 = vsyncpa [#allocation6], 0
    %10 = vsyncpa [#allocation4], 0
    // Predicated region
    $region2: #{tpu_custom_call.1} parent=1 // pred_check
      _
    $region3: #{tpu_custom_call.1} parent=1 // pred_check_branch
      %12 = sbr.rel (0) target = $region5
    $region4: #{tpu_custom_call.1} parent=1 // pred_region
      %14 = vsyncadd [#allocation3], 0
      %s16 = sshll.u32 %s0, 4
      %s17 = int_to_ptr.hbm [resolvable:$true] %s16
      %s18 = sshll.u32 [#allocation2], 4
      %s19 = int_to_ptr.vmem [resolvable:$true] %s18
      %21 = dma.hbm_to_vmem [thread:$0]  %s17, 512, %s19, [#allocation3]
    $region5: #{tpu_custom_call.1} parent=1 // pred_fallthru
      _
    // Predicated region
    $region6: #{tpu_custom_call.1} parent=1 // pred_check
      _
    $region7: #{tpu_custom_call.1} parent=1 // pred_check_branch
      %23 = sbr.rel (0) target = $region9
    $region8: #{tpu_custom_call.1} parent=1 // pred_region
      %25 = vsyncadd [#allocation6], 0
      %s26 = sshll.u32 %s1, 4
      %s27 = int_to_ptr.hbm [resolvable:$true] %s26
      %s28 = sshll.u32 [#allocation5], 4
      %s29 = int_to_ptr.vmem [resolvable:$true] %s28
      %34 = dma.hbm_to_vmem [thread:$0]  %s27, 4096, %s29, [#allocation6], 64, 64, 4
    $region9: #{tpu_custom_call.1} parent=1 // pred_fallthru
      _
    // Predicated region
    $region10: #{tpu_custom_call.1} parent=1 // pred_check
      _
    $region11: #{tpu_custom_call.1} parent=1 // pred_check_branch
      %36 = sbr.rel (0) target = $region13
    $region12: #{tpu_custom_call.1} parent=1 // pred_region
      _
    $region13: #{tpu_custom_call.1} parent=1 // pred_fallthru
      _
    // Predicated region
    $region14: #{tpu_custom_call.1} parent=1 // pred_check
      _
    $region15: #{tpu_custom_call.1} parent=1 // pred_check_branch
      %38 = sbr.rel (0) target = $region17
    $region16: #{tpu_custom_call.1} parent=1 // pred_region
      %40 = dma.done [#allocation3], 512
    $region17: #{tpu_custom_call.1} parent=1 // pred_fallthru
      _
    // Predicated region
    $region18: #{tpu_custom_call.1} parent=1 // pred_check
      _
    $region19: #{tpu_custom_call.1} parent=1 // pred_check_branch
      %42 = sbr.rel (0) target = $region21
    $region20: #{tpu_custom_call.1} parent=1 // pred_region
      %44 = dma.done [#allocation6], 4096
    $region21: #{tpu_custom_call.1} parent=1 // pred_fallthru
      _
    %v45 = vld [vmem:[#allocation2] sm:$0xff]
    %v46 = vld [vmem:[#allocation2 + $0x8] sm:$0xff]
    %v47 = vld [vmem:[#allocation2 + $0x10] sm:$0xff]
    %v48 = vld [vmem:[#allocation2 + $0x18] sm:$0xff]
    %v49 = vpack.c.bf16 %v45, %v45
    %v50 = vpack.c.bf16 %v46, %v46
    %v51 = vpack.c.bf16 %v47, %v47
    %v52 = vpack.c.bf16 %v48, %v48
    %v53 = vld [vmem:[#allocation5] sm:$0xf]
    %v54 = vld [vmem:[#allocation5 + $0x4] sm:$0xf]
    %v55 = vld [vmem:[#allocation5 + $0x8] sm:$0xf]
    %v56 = vld [vmem:[#allocation5 + $0xc] sm:$0xf]
    %v57 = vld [vmem:[#allocation5 + $0x10] sm:$0xf]
    %v58 = vld [vmem:[#allocation5 + $0x14] sm:$0xf]
    %v59 = vld [vmem:[#allocation5 + $0x18] sm:$0xf]
    %v60 = vld [vmem:[#allocation5 + $0x1c] sm:$0xf]
    %v61 = vld [vmem:[#allocation5 + $0x20] sm:$0xf]
    %v62 = vld [vmem:[#allocation5 + $0x24] sm:$0xf]
    %v63 = vld [vmem:[#allocation5 + $0x28] sm:$0xf]
    %v64 = vld [vmem:[#allocation5 + $0x2c] sm:$0xf]
    %v65 = vld [vmem:[#allocation5 + $0x30] sm:$0xf]
    %v66 = vld [vmem:[#allocation5 + $0x34] sm:$0xf]
    %v67 = vld [vmem:[#allocation5 + $0x38] sm:$0xf]
    %v68 = vld [vmem:[#allocation5 + $0x3c] sm:$0xf]
    %v69 = vld [vmem:[#allocation5 + $0x40] sm:$0xf]
    %v70 = vld [vmem:[#allocation5 + $0x44] sm:$0xf]
    %v71 = vld [vmem:[#allocation5 + $0x48] sm:$0xf]
    %v72 = vld [vmem:[#allocation5 + $0x4c] sm:$0xf]
    %v73 = vld [vmem:[#allocation5 + $0x50] sm:$0xf]
    %v74 = vld [vmem:[#allocation5 + $0x54] sm:$0xf]
    %v75 = vld [vmem:[#allocation5 + $0x58] sm:$0xf]
    %v76 = vld [vmem:[#allocation5 + $0x5c] sm:$0xf]
    %v77 = vld [vmem:[#allocation5 + $0x60] sm:$0xf]
    %v78 = vld [vmem:[#allocation5 + $0x64] sm:$0xf]
    %v79 = vld [vmem:[#allocation5 + $0x68] sm:$0xf]
    %v80 = vld [vmem:[#allocation5 + $0x6c] sm:$0xf]
    %v81 = vld [vmem:[#allocation5 + $0x70] sm:$0xf]
    %v82 = vld [vmem:[#allocation5 + $0x74] sm:$0xf]
    %v83 = vld [vmem:[#allocation5 + $0x78] sm:$0xf]
    %v84 = vld [vmem:[#allocation5 + $0x7c] sm:$0xf]
    %v85 = vld [vmem:[#allocation5 + $0x80] sm:$0xf]
    %v86 = vld [vmem:[#allocation5 + $0x84] sm:$0xf]
    %v87 = vld [vmem:[#allocation5 + $0x88] sm:$0xf]
    %v88 = vld [vmem:[#allocation5 + $0x8c] sm:$0xf]
    %v89 = vld [vmem:[#allocation5 + $0x90] sm:$0xf]
    %v90 = vld [vmem:[#allocation5 + $0x94] sm:$0xf]
    %v91 = vld [vmem:[#allocation5 + $0x98] sm:$0xf]
    %v92 = vld [vmem:[#allocation5 + $0x9c] sm:$0xf]
    %v93 = vld [vmem:[#allocation5 + $0xa0] sm:$0xf]
    %v94 = vld [vmem:[#allocation5 + $0xa4] sm:$0xf]
    %v95 = vld [vmem:[#allocation5 + $0xa8] sm:$0xf]
    %v96 = vld [vmem:[#allocation5 + $0xac] sm:$0xf]
    %v97 = vld [vmem:[#allocation5 + $0xb0] sm:$0xf]
    %v98 = vld [vmem:[#allocation5 + $0xb4] sm:$0xf]
    %v99 = vld [vmem:[#allocation5 + $0xb8] sm:$0xf]
    %v100 = vld [vmem:[#allocation5 + $0xbc] sm:$0xf]
    %v101 = vld [vmem:[#allocation5 + $0xc0] sm:$0xf]
    %v102 = vld [vmem:[#allocation5 + $0xc4] sm:$0xf]
    %v103 = vld [vmem:[#allocation5 + $0xc8] sm:$0xf]
    %v104 = vld [vmem:[#allocation5 + $0xcc] sm:$0xf]
    %v105 = vld [vmem:[#allocation5 + $0xd0] sm:$0xf]
    %v106 = vld [vmem:[#allocation5 + $0xd4] sm:$0xf]
    %v107 = vld [vmem:[#allocation5 + $0xd8] sm:$0xf]
    %v108 = vld [vmem:[#allocation5 + $0xdc] sm:$0xf]
    %v109 = vld [vmem:[#allocation5 + $0xe0] sm:$0xf]
    %v110 = vld [vmem:[#allocation5 + $0xe4] sm:$0xf]
    %v111 = vld [vmem:[#allocation5 + $0xe8] sm:$0xf]
    %v112 = vld [vmem:[#allocation5 + $0xec] sm:$0xf]
    %v113 = vld [vmem:[#allocation5 + $0xf0] sm:$0xf]
    %v114 = vld [vmem:[#allocation5 + $0xf4] sm:$0xf]
    %v115 = vld [vmem:[#allocation5 + $0xf8] sm:$0xf]
    %v116 = vld [vmem:[#allocation5 + $0xfc] sm:$0xf]
    %v117 = vld [vmem:[%s2] sm:$0x1]
    %v119 = vperm.slane %v117, 0
    %v185 = vunpack.c.l.b16 %v53
    %v186 = vunpack.c.l.b16 %v54
    %v187 = vunpack.c.l.b16 %v55
    %v188 = vunpack.c.l.b16 %v56
    %v189 = vunpack.c.l.b16 %v57
    %v190 = vunpack.c.l.b16 %v58
    %v191 = vunpack.c.l.b16 %v59
    %v192 = vunpack.c.l.b16 %v60
    %v193 = vunpack.c.l.b16 %v61
    %v194 = vunpack.c.l.b16 %v62
    %v195 = vunpack.c.l.b16 %v63
    %v196 = vunpack.c.l.b16 %v64
    %v197 = vunpack.c.l.b16 %v65
    %v198 = vunpack.c.l.b16 %v66
    %v199 = vunpack.c.l.b16 %v67
    %v200 = vunpack.c.l.b16 %v68
    %v201 = vunpack.c.l.b16 %v69
    %v202 = vunpack.c.l.b16 %v70
    %v203 = vunpack.c.l.b16 %v71
    %v204 = vunpack.c.l.b16 %v72
    %v205 = vunpack.c.l.b16 %v73
    %v206 = vunpack.c.l.b16 %v74
    %v207 = vunpack.c.l.b16 %v75
    %v208 = vunpack.c.l.b16 %v76
    %v209 = vunpack.c.l.b16 %v77
    %v210 = vunpack.c.l.b16 %v78
    %v211 = vunpack.c.l.b16 %v79
    %v212 = vunpack.c.l.b16 %v80
    %v213 = vunpack.c.l.b16 %v81
    %v214 = vunpack.c.l.b16 %v82
    %v215 = vunpack.c.l.b16 %v83
    %v216 = vunpack.c.l.b16 %v84
    %v217 = vunpack.c.l.b16 %v85
    %v218 = vunpack.c.l.b16 %v86
    %v219 = vunpack.c.l.b16 %v87
    %v220 = vunpack.c.l.b16 %v88
    %v221 = vunpack.c.l.b16 %v89
    %v222 = vunpack.c.l.b16 %v90
    %v223 = vunpack.c.l.b16 %v91
    %v224 = vunpack.c.l.b16 %v92
    %v225 = vunpack.c.l.b16 %v93
    %v226 = vunpack.c.l.b16 %v94
    %v227 = vunpack.c.l.b16 %v95
    %v228 = vunpack.c.l.b16 %v96
    %v229 = vunpack.c.l.b16 %v97
    %v230 = vunpack.c.l.b16 %v98
    %v231 = vunpack.c.l.b16 %v99
    %v232 = vunpack.c.l.b16 %v100
    %v233 = vunpack.c.l.b16 %v101
    %v234 = vunpack.c.l.b16 %v102
    %v235 = vunpack.c.l.b16 %v103
    %v236 = vunpack.c.l.b16 %v104
    %v237 = vunpack.c.l.b16 %v105
    %v238 = vunpack.c.l.b16 %v106
    %v239 = vunpack.c.l.b16 %v107
    %v240 = vunpack.c.l.b16 %v108
    %v241 = vunpack.c.l.b16 %v109
    %v242 = vunpack.c.l.b16 %v110
    %v243 = vunpack.c.l.b16 %v111
    %v244 = vunpack.c.l.b16 %v112
    %v245 = vunpack.c.l.b16 %v113
    %v246 = vunpack.c.l.b16 %v114
    %v247 = vunpack.c.l.b16 %v115
    %v248 = vunpack.c.l.b16 %v116
    %v249 = vpack.c.b16 %v186, %v185
    %v250 = vpack.c.b16 %v188, %v187
    %v251 = vpack.c.b16 %v190, %v189
    %v252 = vpack.c.b16 %v192, %v191
    %v253 = vpack.c.b16 %v194, %v193
    %v254 = vpack.c.b16 %v196, %v195
    %v255 = vpack.c.b16 %v198, %v197
    %v256 = vpack.c.b16 %v200, %v199
    %v257 = vpack.c.b16 %v202, %v201
    %v258 = vpack.c.b16 %v204, %v203
    %v259 = vpack.c.b16 %v206, %v205
    %v260 = vpack.c.b16 %v208, %v207
    %v261 = vpack.c.b16 %v210, %v209
    %v262 = vpack.c.b16 %v212, %v211
    %v263 = vpack.c.b16 %v214, %v213
    %v264 = vpack.c.b16 %v216, %v215
    %v265 = vpack.c.b16 %v218, %v217
    %v266 = vpack.c.b16 %v220, %v219
    %v267 = vpack.c.b16 %v222, %v221
    %v268 = vpack.c.b16 %v224, %v223
    %v269 = vpack.c.b16 %v226, %v225
    %v270 = vpack.c.b16 %v228, %v227
    %v271 = vpack.c.b16 %v230, %v229
    %v272 = vpack.c.b16 %v232, %v231
    %v273 = vpack.c.b16 %v234, %v233
    %v274 = vpack.c.b16 %v236, %v235
    %v275 = vpack.c.b16 %v238, %v237
    %v276 = vpack.c.b16 %v240, %v239
    %v277 = vpack.c.b16 %v242, %v241
    %v278 = vpack.c.b16 %v244, %v243
    %v279 = vpack.c.b16 %v246, %v245
    %v280 = vpack.c.b16 %v248, %v247
    %313 = vmatpush.bf16.msra.mxu0 %v256
    %314 = vmatpush.bf16.msra.mxu0 %v255
    %315 = vmatpush.bf16.msra.mxu0 %v254
    %316 = vmatpush.bf16.msra.mxu0 %v253
    %317 = vmatpush.bf16.msra.mxu0 %v252
    %318 = vmatpush.bf16.msra.mxu0 %v251
    %319 = vmatpush.bf16.msra.mxu0 %v250
    %320 = vmatpush.bf16.msra.mxu0 %v249
    %321 = vmatmul.bf16.gmra.mxu0 %v49
    %v322 = vpop.f32.mrf.mxu0
    %v323 = vadd.f32 %v119, %v322
    %v324 = vpop.f32.mrf.mxu0
    %325 = vdwg.mxu0
    %326 = vmatpush.bf16.msra.mxu0 %v264
    %327 = vmatpush.bf16.msra.mxu0 %v263
    %328 = vmatpush.bf16.msra.mxu0 %v262
    %329 = vmatpush.bf16.msra.mxu0 %v261
    %330 = vmatpush.bf16.msra.mxu0 %v260
    %331 = vmatpush.bf16.msra.mxu0 %v259
    %332 = vmatpush.bf16.msra.mxu0 %v258
    %333 = vmatpush.bf16.msra.mxu0 %v257
    %334 = vmatmul.bf16.gmra.mxu0 %v50
    %v335 = vpop.f32.mrf.mxu0
    %v336 = vadd.f32 %v323, %v335
    %v337 = vpop.f32.mrf.mxu0
    %338 = vdwg.mxu0
    %339 = vmatpush.bf16.msra.mxu0 %v272
    %340 = vmatpush.bf16.msra.mxu0 %v271
    %341 = vmatpush.bf16.msra.mxu0 %v270
    %342 = vmatpush.bf16.msra.mxu0 %v269
    %343 = vmatpush.bf16.msra.mxu0 %v268
    %344 = vmatpush.bf16.msra.mxu0 %v267
    %345 = vmatpush.bf16.msra.mxu0 %v266
    %346 = vmatpush.bf16.msra.mxu0 %v265
    %347 = vmatmul.bf16.gmra.mxu0 %v51
    %v348 = vpop.f32.mrf.mxu0
    %v349 = vadd.f32 %v336, %v348
    %v350 = vpop.f32.mrf.mxu0
    %351 = vdwg.mxu0
    %352 = vmatpush.bf16.msra.mxu0 %v280
    %353 = vmatpush.bf16.msra.mxu0 %v279
    %354 = vmatpush.bf16.msra.mxu0 %v278
    %355 = vmatpush.bf16.msra.mxu0 %v277
    %356 = vmatpush.bf16.msra.mxu0 %v276
    %357 = vmatpush.bf16.msra.mxu0 %v275
    %358 = vmatpush.bf16.msra.mxu0 %v274
    %359 = vmatpush.bf16.msra.mxu0 %v273
    %360 = vmatmul.bf16.gmra.mxu0 %v52
    %v361 = vpop.f32.mrf.mxu0
    %v362 = vadd.f32 %v349, %v361
    %v363 = vpop.f32.mrf.mxu0
    %364 = vdwg.mxu0
    %v365 = vmax.f32 %v362, 0.0
    %v366 = vpack.c.bf16 %v365, %v365
    %367 = vst [vmem:[#allocation7] sm:$0xf] %v366
    // Predicated region
    $region22: #{tpu_custom_call.1} parent=1 // pred_check
      _
    $region23: #{tpu_custom_call.1} parent=1 // pred_check_branch
      %369 = sbr.rel (0) target = $region25
    $region24: #{tpu_custom_call.1} parent=1 // pred_region
      %371 = vsyncadd [#allocation4], 0
      %s373 = sshll.u32 [#allocation7], 4
      %s374 = int_to_ptr.vmem [resolvable:$true] %s373
      %s375 = sshll.u32 %s3, 4
      %s376 = int_to_ptr.hbm [resolvable:$true] %s375
      %378 = dma.vmem_to_hbm [thread:$0]  %s374, 64, %s376, [#allocation4]
    $region25: #{tpu_custom_call.1} parent=1 // pred_fallthru
      _
    // Predicated region
    $region26: #{tpu_custom_call.1} parent=1 // pred_check
      _
    $region27: #{tpu_custom_call.1} parent=1 // pred_check_branch
      %380 = sbr.rel (0) target = $region29
    $region28: #{tpu_custom_call.1} parent=1 // pred_region
      %382 = dma.done [#allocation4], 64
    $region29: #{tpu_custom_call.1} parent=1 // pred_fallthru
      _
    %383 = vsyncpa [#allocation3], 1
    %384 = vsyncpa [#allocation6], 1
    %385 = vsyncpa [#allocation4], 1

</llo_original>
